<compile_context>
chip_gen: v6e
topology: v6e:2x2x1
jax: 0.10.0
libtpu: 0.0.40
codegen_flags: <defaults>
</compile_context>

<pallas_src>
import jax
import jax.numpy as jnp
from jax import lax
from jax.experimental import pallas as pl
from jax.experimental.pallas import tpu as pltpu

HIDDEN = 256   # hidden_size (module default)
VOCAB = 64     # input_size (small vocab for the example)
SEQ = 8        # example sequence length for the fused-recurrence call


def gru_seq_kernel(tok_ref,      # SMEM (S,)     int32  token ids (scalar prefetch)
                   gi_tab_ref,   # VMEM (V, 3H)  f32    emb @ W_ih^T + b_ih (hoisted)
                   h0_ref,       # VMEM (1, H)   f32    initial hidden state
                   whh_ref,      # VMEM (H, 3H)  bf16   W_hh^T (resident all sequence)
                   bhh_ref,      # VMEM (1, 3H)  f32    b_hh
                   out_ref):     # VMEM (S, H)   f32    per-step GRU outputs
    H = h0_ref.shape[-1]
    S = out_ref.shape[0]

    # Hoisted once; large operands stay VMEM-backed for the MXU.
    whh = whh_ref[...]
    bhh = bhh_ref[...]
    b_rz = bhh[:, :2 * H]
    b_n = bhh[:, 2 * H:]

    def step(t, h):
        tok = tok_ref[t]                                   # SMEM scalar read
        # Row gather from the resident precomputed-gi table (b_ih already folded in).
        gi = gi_tab_ref[pl.ds(tok, 1), :]                  # (1, 3H) f32
        # Recurrent projection: the only truly sequential matmul.
        gh = jnp.dot(h.astype(jnp.bfloat16), whh,
                     preferred_element_type=jnp.float32)   # (1, 3H) f32
        # PyTorch GRU gate math, gate order (r, z, n).
        rz = jax.nn.sigmoid(gi[:, :2 * H] + gh[:, :2 * H] + b_rz)
        r = rz[:, :H]
        z = rz[:, H:]
        n = jnp.tanh(gi[:, 2 * H:] + r * (gh[:, 2 * H:] + b_n))
        h_new = (1.0 - z) * n + z * h
        out_ref[pl.ds(t, 1), :] = h_new                    # row t of resident slab
        return h_new

    # Unrolled so the LLO scheduler can overlap non-dependent work across steps.
    lax.fori_loop(0, S, step, h0_ref[...], unroll=True)


def encoder_rnn_seq(tokens, hidden, params):
    """Run the EncoderRNN GRU over a token sequence inside one pallas_call.

    tokens: (S,) int32 token ids; hidden: (1, 1, H) f32.
    Returns (outputs (S, 1, H), hidden (1, 1, H)) — equivalent to calling
    EncoderRNN.forward once per token, threading the hidden state."""
    gi_tab, whh_t, b_hh = params
    V, threeH = gi_tab.shape
    H = threeH // 3
    S = int(tokens.shape[0])
    tok = tokens.astype(jnp.int32)
    h0 = jnp.reshape(hidden, (1, H)).astype(jnp.float32)

    grid_spec = pltpu.PrefetchScalarGridSpec(
        num_scalar_prefetch=1,
        grid=(1,),   # single program; the time loop lives inside the kernel
        in_specs=[
            pl.BlockSpec((V, threeH), lambda i, tok_ref: (0, 0)),   # gi table
            pl.BlockSpec((1, H), lambda i, tok_ref: (0, 0)),        # h0
            pl.BlockSpec((H, threeH), lambda i, tok_ref: (0, 0)),   # W_hh^T
            pl.BlockSpec((1, threeH), lambda i, tok_ref: (0, 0)),   # b_hh
        ],
        out_specs=pl.BlockSpec((S, H), lambda i, tok_ref: (0, 0)),  # output slab
    )

    out = pl.pallas_call(
        gru_seq_kernel,
        out_shape=jax.ShapeDtypeStruct((S, H), jnp.float32),
        grid_spec=grid_spec,
        compiler_params=pltpu.CompilerParams(
            dimension_semantics=("arbitrary",)),
    )(tok, gi_tab, h0, whh_t, b_hh)

    # Final hidden state == GRU output of the last step (single-layer, unidirectional).
    return out.reshape(S, 1, H), out[S - 1:].reshape(1, 1, H)


def encoder_rnn_forward(token, hidden, params):
    """Exact analogue of EncoderRNN.forward(input, hidden): one token.
    Returns (output, hidden), each (1, 1, H)."""
    tok = jnp.reshape(token, (1,)).astype(jnp.int32)
    out, h_new = encoder_rnn_seq(tok, hidden, params)
    H = out.shape[-1]
    return out.reshape(1, 1, H), h_new


def init_params(key, vocab, hidden):
    """Deterministic init matching EncoderRNN.__init__ shapes.

    The input projection is hoisted: gi_tab[v] = emb[v] @ W_ih^T + b_ih (f32),
    so only W_hh^T (bf16, transposed for x @ W^T on the MXU) and b_hh are
    needed inside the recurrence."""
    k_emb, k_wih, k_whh, k_bih, k_bhh = jax.random.split(key, 5)
    bound = 1.0 / jnp.sqrt(hidden)
    emb = jax.random.normal(k_emb, (vocab, hidden), jnp.float32)
    wih_t = jax.random.uniform(k_wih, (hidden, 3 * hidden), jnp.float32, -bound, bound)
    whh_t = jax.random.uniform(k_whh, (hidden, 3 * hidden), jnp.float32, -bound, bound)
    b_ih = jax.random.uniform(k_bih, (1, 3 * hidden), jnp.float32, -bound, bound)
    b_hh = jax.random.uniform(k_bhh, (1, 3 * hidden), jnp.float32, -bound, bound)

    emb_bf = emb.astype(jnp.bfloat16)
    wih_bf = wih_t.astype(jnp.bfloat16)
    whh_bf = whh_t.astype(jnp.bfloat16)

    # Hoisted input projection table (b_ih folded in), computed once.
    gi_tab = jnp.dot(emb_bf, wih_bf, preferred_element_type=jnp.float32) + b_ih
    return gi_tab, whh_bf, b_hh


def reference_forward_seq(tokens, hidden, params):
    """Pure-JAX reference of the same math (identical bf16 casts / gi table)."""
    gi_tab, whh_t, b_hh = params
    H = whh_t.shape[0]
    h = jnp.reshape(hidden, (1, H)).astype(jnp.float32)
    outs = []
    for t in range(int(tokens.shape[0])):
        gi = gi_tab[tokens[t]][None, :]                          # (1, 3H) f32
        gh = jnp.dot(h.astype(jnp.bfloat16), whh_t,
                     preferred_element_type=jnp.float32)
        rz = jax.nn.sigmoid(gi[:, :2 * H] + gh[:, :2 * H] + b_hh[:, :2 * H])
        r, z = rz[:, :H], rz[:, H:]
        n = jnp.tanh(gi[:, 2 * H:] + r * (gh[:, 2 * H:] + b_hh[:, 2 * H:]))
        h = (1.0 - z) * n + z * h
        outs.append(h)
    return jnp.stack(outs, 0).reshape(-1, 1, H), h.reshape(1, 1, H)


if __name__ == "__main__":
    key = jax.random.PRNGKey(0)
    params = init_params(key, VOCAB, HIDDEN)
    hidden0 = jnp.zeros((1, 1, HIDDEN), jnp.float32)   # initHidden()

    # 1) Single-token forward: exact EncoderRNN.forward semantics.
    token = jnp.array(5, dtype=jnp.int32)
    out1, h1 = encoder_rnn_forward(token, hidden0, params)
    out1, h1 = jax.block_until_ready((out1, h1))
    ref_o1, ref_h1 = reference_forward_seq(jnp.reshape(token, (1,)), hidden0, params)
    assert out1.shape == (1, 1, HIDDEN) and h1.shape == (1, 1, HIDDEN)
    assert jnp.allclose(out1, ref_o1, atol=1e-3, rtol=1e-3)
    assert jnp.allclose(h1, ref_h1, atol=1e-3, rtol=1e-3)

    # 2) Fused-recurrence version: whole sequence in one pallas_call.
    tokens = jax.random.randint(jax.random.PRNGKey(1), (SEQ,), 0, VOCAB,
                                dtype=jnp.int32)
    outs, h_fin = encoder_rnn_seq(tokens, hidden0, params)
    outs, h_fin = jax.block_until_ready((outs, h_fin))
    ref_outs, ref_hf = reference_forward_seq(tokens, hidden0, params)
    assert outs.shape == (SEQ, 1, HIDDEN) and h_fin.shape == (1, 1, HIDDEN)
    assert jnp.allclose(outs, ref_outs, atol=1e-3, rtol=1e-3)
    assert jnp.allclose(h_fin, ref_hf, atol=1e-3, rtol=1e-3)

    print("KERNEL_OK")
</pallas_src>

<mosaic_0001>
module attributes {stable_mosaic.version = 11 : i64} {
  func.func @gru_seq_kernel(%arg0: i32, %arg1: memref<1xi32, #tpu.memory_space<smem>>, %arg2: memref<64x768xf32, #tpu.memory_space<vmem>>, %arg3: memref<1x256xf32, #tpu.memory_space<vmem>>, %arg4: memref<256x768xbf16, #tpu.memory_space<vmem>>, %arg5: memref<1x768xf32, #tpu.memory_space<vmem>>, %arg6: memref<1x256xf32, #tpu.memory_space<vmem>>) attributes {dimension_semantics = [#tpu.dimension_semantics<arbitrary>], iteration_bounds = array<i64: 1>, scalar_prefetch = 1 : i64, scratch_operands = 0 : i64, tpu.core_type = #tpu.core_type<tc>, window_params = [{pipeline_mode = #tpu.pipeline_mode<synchronous>, transform_indices = @transform_0, window_bounds = array<i64: 64, 768>}, {pipeline_mode = #tpu.pipeline_mode<synchronous>, transform_indices = @transform_1, window_bounds = array<i64: 1, 256>}, {pipeline_mode = #tpu.pipeline_mode<synchronous>, transform_indices = @transform_2, window_bounds = array<i64: 256, 768>}, {pipeline_mode = #tpu.pipeline_mode<synchronous>, transform_indices = @transform_3, window_bounds = array<i64: 1, 768>}, {pipeline_mode = #tpu.pipeline_mode<synchronous>, transform_indices = @transform_4, window_bounds = array<i64: 1, 256>}]} {
    %c0 = arith.constant 0 : index
    %c0_0 = arith.constant 0 : index
    %0 = vector.load %arg4[%c0, %c0_0] : memref<256x768xbf16, #tpu.memory_space<vmem>>, vector<256x768xbf16>
    %c0_1 = arith.constant 0 : index
    %c0_2 = arith.constant 0 : index
    %1 = vector.load %arg5[%c0_1, %c0_2] : memref<1x768xf32, #tpu.memory_space<vmem>>, vector<1x768xf32>
    %2 = vector.extract_strided_slice %1 {offsets = [0, 0], sizes = [1, 512], strides = [1, 1]} : vector<1x768xf32> to vector<1x512xf32>
    %3 = vector.extract_strided_slice %1 {offsets = [0, 512], sizes = [1, 256], strides = [1, 1]} : vector<1x768xf32> to vector<1x256xf32>
    %c0_3 = arith.constant 0 : index
    %c0_4 = arith.constant 0 : index
    %4 = vector.load %arg3[%c0_3, %c0_4] : memref<1x256xf32, #tpu.memory_space<vmem>>, vector<1x256xf32>
    %c0_i32 = arith.constant 0 : i32
    %5 = arith.index_cast %c0_i32 : i32 to index
    %6 = memref.load %arg1[%5] : memref<1xi32, #tpu.memory_space<smem>>
    %7 = arith.index_cast %6 : i32 to index
    %c0_5 = arith.constant 0 : index
    %8 = vector.load %arg2[%7, %c0_5] : memref<64x768xf32, #tpu.memory_space<vmem>>, vector<1x768xf32>
    %9 = arith.truncf %4 : vector<1x256xf32> to vector<1x256xbf16>
    %cst = arith.constant dense<0.000000e+00> : vector<1x768xf32>
    %10 = tpu.matmul %9, %0, %cst {dimension_numbers = #tpu.dot_dimension_numbers<[1], [0], [0], [1], [0, 0, 1, 1], [], []>} : vector<1x256xbf16>, vector<256x768xbf16>, vector<1x768xf32> -> vector<1x768xf32>
    %11 = vector.extract_strided_slice %8 {offsets = [0, 0], sizes = [1, 512], strides = [1, 1]} : vector<1x768xf32> to vector<1x512xf32>
    %12 = vector.extract_strided_slice %10 {offsets = [0, 0], sizes = [1, 512], strides = [1, 1]} : vector<1x768xf32> to vector<1x512xf32>
    %13 = arith.addf %11, %12 : vector<1x512xf32>
    %14 = arith.addf %13, %2 : vector<1x512xf32>
    %15 = arith.negf %14 : vector<1x512xf32>
    %16 = math.exp %15 : vector<1x512xf32>
    %cst_6 = arith.constant 1.000000e+00 : f32
    %17 = vector.broadcast %cst_6 : f32 to vector<1x512xf32>
    %18 = arith.addf %17, %16 : vector<1x512xf32>
    %19 = arith.divf %17, %18 : vector<1x512xf32>
    %20 = vector.extract_strided_slice %19 {offsets = [0, 0], sizes = [1, 256], strides = [1, 1]} : vector<1x512xf32> to vector<1x256xf32>
    %21 = vector.extract_strided_slice %19 {offsets = [0, 256], sizes = [1, 256], strides = [1, 1]} : vector<1x512xf32> to vector<1x256xf32>
    %22 = vector.extract_strided_slice %8 {offsets = [0, 512], sizes = [1, 256], strides = [1, 1]} : vector<1x768xf32> to vector<1x256xf32>
    %23 = vector.extract_strided_slice %10 {offsets = [0, 512], sizes = [1, 256], strides = [1, 1]} : vector<1x768xf32> to vector<1x256xf32>
    %24 = arith.addf %23, %3 : vector<1x256xf32>
    %25 = arith.mulf %20, %24 : vector<1x256xf32>
    %26 = arith.addf %22, %25 : vector<1x256xf32>
    %27 = math.tanh %26 : vector<1x256xf32>
    %cst_7 = arith.constant 1.000000e+00 : f32
    %28 = vector.broadcast %cst_7 : f32 to vector<1x256xf32>
    %29 = arith.subf %28, %21 : vector<1x256xf32>
    %30 = arith.mulf %29, %27 : vector<1x256xf32>
    %31 = arith.mulf %21, %4 : vector<1x256xf32>
    %32 = arith.addf %30, %31 : vector<1x256xf32>
    %33 = arith.index_cast %c0_i32 : i32 to index
    %c0_8 = arith.constant 0 : index
    %34 = vector.load %arg6[%33, %c0_8] : memref<1x256xf32, #tpu.memory_space<vmem>>, vector<1x256xf32>
    tpu.vector_store %arg6[%33, %c0_8], %32 {strides = array<i32>} : memref<1x256xf32, #tpu.memory_space<vmem>>, vector<1x256xf32>,
    %c1_i32 = arith.constant 1 : i32
    return
  }
  func.func @transform_0(%arg0: i32, %arg1: memref<1xi32, #tpu.memory_space<smem>>) -> (i32, i32) {
    %c0_i32 = arith.constant 0 : i32
    %c0_i32_0 = arith.constant 0 : i32
    %c0_i32_1 = arith.constant 0 : i32
    return %c0_i32, %c0_i32_0 : i32, i32
  }
  func.func @transform_1(%arg0: i32, %arg1: memref<1xi32, #tpu.memory_space<smem>>) -> (i32, i32) {
    %c0_i32 = arith.constant 0 : i32
    %c0_i32_0 = arith.constant 0 : i32
    %c0_i32_1 = arith.constant 0 : i32
    return %c0_i32, %c0_i32_0 : i32, i32
  }
  func.func @transform_2(%arg0: i32, %arg1: memref<1xi32, #tpu.memory_space<smem>>) -> (i32, i32) {
    %c0_i32 = arith.constant 0 : i32
    %c0_i32_0 = arith.constant 0 : i32
    %c0_i32_1 = arith.constant 0 : i32
    return %c0_i32, %c0_i32_0 : i32, i32
  }
  func.func @transform_3(%arg0: i32, %arg1: memref<1xi32, #tpu.memory_space<smem>>) -> (i32, i32) {
    %c0_i32 = arith.constant 0 : i32
    %c0_i32_0 = arith.constant 0 : i32
    %c0_i32_1 = arith.constant 0 : i32
    return %c0_i32, %c0_i32_0 : i32, i32
  }
  func.func @transform_4(%arg0: i32, %arg1: memref<1xi32, #tpu.memory_space<smem>>) -> (i32, i32) {
    %c0_i32 = arith.constant 0 : i32
    %c0_i32_0 = arith.constant 0 : i32
    %c0_i32_1 = arith.constant 0 : i32
    return %c0_i32, %c0_i32_0 : i32, i32
  }
}

</mosaic_0001>

<llo_original>
// kernel: tpu_custom_call.1
$region0: #{tpu_custom_call.1}
  #allocation0 [shape = 'u32[]', space=smem, size = 0x4, offset = 0x4, fixed_abs, tag = 'smem constant byte address 0x4 - core index']
  #allocation1 [shape = 'u32[144,128]{1,0:T(1,128)}', space=vmem, size = 0x12000, scoped, tag = 'internal scratch']
  #allocation2 [shape = 's32[1]{0}', space=sflag, size = 0x4, scoped, tag = 'scoped memory for tpu_custom_call.1']
  #allocation3 [shape = 's32[1]{0:T(128)S(6)}', space=smem, size = 0x200, scoped, tag = 'prefetched SMEM operand 0']
  %s0 = inlined_call_operand.<no memory space> [shape: s32[1], index: 0, kind: input, shape index: {}]
  %s1 = inlined_call_operand.hbm [shape: f32[64,768], index: 1, kind: input, shape index: {}]
  %s2 = inlined_call_operand.hbm [shape: f32[1,256], index: 2, kind: input, shape index: {}]
  %s3 = inlined_call_operand.hbm [shape: bf16[256,768], index: 3, kind: input, shape index: {}]
  %s4 = inlined_call_operand.vmem [shape: f32[1,768], index: 4, kind: input, shape index: {}]
  %s5 = inlined_call_operand.hbm [shape: f32[1,256], index: 5, kind: output, shape index: {}]
  %s6 = sld [smem:[#allocation0]]
  $region38: #{tpu_custom_call.1} parent=0
    _
  %s8 = ssub.s32 1, %s6
  %s9 = scalar_select 0, %s8, %s6
  %10 = sst [smem:[#allocation3]] %s0
  $region1: #{tpu_custom_call.1} parent=0
    #allocation4 [shape = 'u8[196608]{0}', space=vmem, size = 0x30000, scoped, tag = 'input window, operand 1, single buffered']
    #allocation5 [shape = 's32[1]{0}', space=sflag, size = 0x4, scoped, tag = 'scoped memory for tpu_custom_call.1']
    #allocation6 [shape = 's32[1]{0}', space=sflag, size = 0x4, scoped, tag = 'scoped memory for tpu_custom_call.1']
    #allocation7 [shape = 'u8[1024]{0}', space=vmem, size = 0x400, scoped, tag = 'input window, operand 2, single buffered']
    #allocation8 [shape = 's32[1]{0}', space=sflag, size = 0x4, scoped, tag = 'scoped memory for tpu_custom_call.1']
    #allocation9 [shape = 'u8[393216]{0}', space=vmem, size = 0x60000, scoped, tag = 'input window, operand 3, single buffered']
    #allocation10 [shape = 'u8[1024]{0}', space=vmem, size = 0x400, scoped, tag = 'output window, operand 0, single buffered']
    %11 = vsyncpa [#allocation5], 0
    %12 = vsyncpa [#allocation8], 0
    %13 = vsyncpa [#allocation6], 0
    // Predicated region
    $region2: #{tpu_custom_call.1} parent=1 // pred_check
      _
    $region3: #{tpu_custom_call.1} parent=1 // pred_check_branch
      %15 = sbr.rel (0) target = $region5
    $region4: #{tpu_custom_call.1} parent=1 // pred_region
      %s17 = ssub.s32 6144, 6144
      %18 = vsyncadd [#allocation5], %s17
      %s19 = sshll.u32 [#allocation4], 4
      %s20 = int_to_ptr.vmem [resolvable:$true] %s19
      %25 = dma.hbm_to_vmem [thread:$0]  %s1, 6144, %s20, [#allocation5], 768, 768, 48
    $region5: #{tpu_custom_call.1} parent=1 // pred_fallthru
      _
    // Predicated region
    $region6: #{tpu_custom_call.1} parent=1 // pred_check
      _
    $region7: #{tpu_custom_call.1} parent=1 // pred_check_branch
      %27 = sbr.rel (0) target = $region9
    $region8: #{tpu_custom_call.1} parent=1 // pred_region
      %s29 = ssub.s32 32, 32
      %30 = vsyncadd [#allocation8], %s29
      %s32 = sshll.u32 [#allocation7], 4
      %s33 = int_to_ptr.vmem [resolvable:$true] %s32
      %35 = dma.hbm_to_vmem [thread:$0]  %s2, 32, %s33, [#allocation8]
    $region9: #{tpu_custom_call.1} parent=1 // pred_fallthru
      _
    // Predicated region
    $region10: #{tpu_custom_call.1} parent=1 // pred_check
      _
    $region11: #{tpu_custom_call.1} parent=1 // pred_check_branch
      %37 = sbr.rel (0) target = $region13
    $region12: #{tpu_custom_call.1} parent=1 // pred_region
      %s39 = ssub.s32 12288, 12288
      %40 = vsyncadd [#allocation8], %s39
      %s41 = sshll.u32 [#allocation9], 4
      %s42 = int_to_ptr.vmem [resolvable:$true] %s41
      %47 = dma.hbm_to_vmem [thread:$0]  %s3, 12288, %s42, [#allocation8], 384, 384, 24
    $region13: #{tpu_custom_call.1} parent=1 // pred_fallthru
      _
    // Predicated region
    $region14: #{tpu_custom_call.1} parent=1 // pred_check
      _
    $region15: #{tpu_custom_call.1} parent=1 // pred_check_branch
      %49 = sbr.rel (0) target = $region17
    $region16: #{tpu_custom_call.1} parent=1 // pred_region
      _
    $region17: #{tpu_custom_call.1} parent=1 // pred_fallthru
      _
    // Predicated region
    $region18: #{tpu_custom_call.1} parent=1 // pred_check
      _
    $region19: #{tpu_custom_call.1} parent=1 // pred_check_branch
      %51 = sbr.rel (0) target = $region21
    $region20: #{tpu_custom_call.1} parent=1 // pred_region
      %52 = dma.done [#allocation5], 6144
    $region21: #{tpu_custom_call.1} parent=1 // pred_fallthru
      _
    // Predicated region
    $region22: #{tpu_custom_call.1} parent=1 // pred_check
      _
    $region23: #{tpu_custom_call.1} parent=1 // pred_check_branch
      %54 = sbr.rel (0) target = $region25
    $region24: #{tpu_custom_call.1} parent=1 // pred_region
      %55 = dma.done [#allocation8], 32
    $region25: #{tpu_custom_call.1} parent=1 // pred_fallthru
      _
    // Predicated region
    $region26: #{tpu_custom_call.1} parent=1 // pred_check
      _
    $region27: #{tpu_custom_call.1} parent=1 // pred_check_branch
      %57 = sbr.rel (0) target = $region29
    $region28: #{tpu_custom_call.1} parent=1 // pred_region
      %58 = dma.done [#allocation8], 12288
    $region29: #{tpu_custom_call.1} parent=1 // pred_fallthru
      _
    %v59 = vld [vmem:[#allocation9] sm:$0xff]
    %v60 = vld [vmem:[#allocation9 + $0x8] sm:$0xff]
    %v61 = vld [vmem:[#allocation9 + $0x10] sm:$0xff]
    %v62 = vld [vmem:[#allocation9 + $0x18] sm:$0xff]
    %v63 = vld [vmem:[#allocation9 + $0x20] sm:$0xff]
    %v64 = vld [vmem:[#allocation9 + $0x28] sm:$0xff]
    %v65 = vld [vmem:[#allocation9 + $0x30] sm:$0xff]
    %v66 = vld [vmem:[#allocation9 + $0x38] sm:$0xff]
    %v67 = vld [vmem:[#allocation9 + $0x40] sm:$0xff]
    %v68 = vld [vmem:[#allocation9 + $0x48] sm:$0xff]
    %v69 = vld [vmem:[#allocation9 + $0x50] sm:$0xff]
    %v70 = vld [vmem:[#allocation9 + $0x58] sm:$0xff]
    %v71 = vld [vmem:[#allocation9 + $0x60] sm:$0xff]
    %v72 = vld [vmem:[#allocation9 + $0x68] sm:$0xff]
    %v73 = vld [vmem:[#allocation9 + $0x70] sm:$0xff]
    %v74 = vld [vmem:[#allocation9 + $0x78] sm:$0xff]
    %v75 = vld [vmem:[#allocation9 + $0x80] sm:$0xff]
    %v76 = vld [vmem:[#allocation9 + $0x88] sm:$0xff]
    %v77 = vld [vmem:[#allocation9 + $0x90] sm:$0xff]
    %v78 = vld [vmem:[#allocation9 + $0x98] sm:$0xff]
    %v79 = vld [vmem:[#allocation9 + $0xa0] sm:$0xff]
    %v80 = vld [vmem:[#allocation9 + $0xa8] sm:$0xff]
    %v81 = vld [vmem:[#allocation9 + $0xb0] sm:$0xff]
    %v82 = vld [vmem:[#allocation9 + $0xb8] sm:$0xff]
    %v83 = vld [vmem:[#allocation9 + $0xc0] sm:$0xff]
    %v84 = vld [vmem:[#allocation9 + $0xc8] sm:$0xff]
    %v85 = vld [vmem:[#allocation9 + $0xd0] sm:$0xff]
    %v86 = vld [vmem:[#allocation9 + $0xd8] sm:$0xff]
    %v87 = vld [vmem:[#allocation9 + $0xe0] sm:$0xff]
    %v88 = vld [vmem:[#allocation9 + $0xe8] sm:$0xff]
    %v89 = vld [vmem:[#allocation9 + $0xf0] sm:$0xff]
    %v90 = vld [vmem:[#allocation9 + $0xf8] sm:$0xff]
    %v91 = vld [vmem:[#allocation9 + $0x100] sm:$0xff]
    %v92 = vld [vmem:[#allocation9 + $0x108] sm:$0xff]
    %v93 = vld [vmem:[#allocation9 + $0x110] sm:$0xff]
    %v94 = vld [vmem:[#allocation9 + $0x118] sm:$0xff]
    %v95 = vld [vmem:[#allocation9 + $0x120] sm:$0xff]
    %v96 = vld [vmem:[#allocation9 + $0x128] sm:$0xff]
    %v97 = vld [vmem:[#allocation9 + $0x130] sm:$0xff]
    %v98 = vld [vmem:[#allocation9 + $0x138] sm:$0xff]
    %v99 = vld [vmem:[#allocation9 + $0x140] sm:$0xff]
    %v100 = vld [vmem:[#allocation9 + $0x148] sm:$0xff]
    %v101 = vld [vmem:[#allocation9 + $0x150] sm:$0xff]
    %v102 = vld [vmem:[#allocation9 + $0x158] sm:$0xff]
    %v103 = vld [vmem:[#allocation9 + $0x160] sm:$0xff]
    %v104 = vld [vmem:[#allocation9 + $0x168] sm:$0xff]
    %v105 = vld [vmem:[#allocation9 + $0x170] sm:$0xff]
    %v106 = vld [vmem:[#allocation9 + $0x178] sm:$0xff]
    %v107 = vld [vmem:[#allocation9 + $0x180] sm:$0xff]
    %v108 = vld [vmem:[#allocation9 + $0x188] sm:$0xff]
    %v109 = vld [vmem:[#allocation9 + $0x190] sm:$0xff]
    %v110 = vld [vmem:[#allocation9 + $0x198] sm:$0xff]
    %v111 = vld [vmem:[#allocation9 + $0x1a0] sm:$0xff]
    %v112 = vld [vmem:[#allocation9 + $0x1a8] sm:$0xff]
    %v113 = vld [vmem:[#allocation9 + $0x1b0] sm:$0xff]
    %v114 = vld [vmem:[#allocation9 + $0x1b8] sm:$0xff]
    %v115 = vld [vmem:[#allocation9 + $0x1c0] sm:$0xff]
    %v116 = vld [vmem:[#allocation9 + $0x1c8] sm:$0xff]
    %v117 = vld [vmem:[#allocation9 + $0x1d0] sm:$0xff]
    %v118 = vld [vmem:[#allocation9 + $0x1d8] sm:$0xff]
    %v119 = vld [vmem:[#allocation9 + $0x1e0] sm:$0xff]
    %v120 = vld [vmem:[#allocation9 + $0x1e8] sm:$0xff]
    %v121 = vld [vmem:[#allocation9 + $0x1f0] sm:$0xff]
    %v122 = vld [vmem:[#allocation9 + $0x1f8] sm:$0xff]
    %v123 = vld [vmem:[#allocation9 + $0x200] sm:$0xff]
    %v124 = vld [vmem:[#allocation9 + $0x208] sm:$0xff]
    %v125 = vld [vmem:[#allocation9 + $0x210] sm:$0xff]
    %v126 = vld [vmem:[#allocation9 + $0x218] sm:$0xff]
    %v127 = vld [vmem:[#allocation9 + $0x220] sm:$0xff]
    %v128 = vld [vmem:[#allocation9 + $0x228] sm:$0xff]
    %v129 = vld [vmem:[#allocation9 + $0x230] sm:$0xff]
    %v130 = vld [vmem:[#allocation9 + $0x238] sm:$0xff]
    %v131 = vld [vmem:[#allocation9 + $0x240] sm:$0xff]
    %v132 = vld [vmem:[#allocation9 + $0x248] sm:$0xff]
    %v133 = vld [vmem:[#allocation9 + $0x250] sm:$0xff]
    %v134 = vld [vmem:[#allocation9 + $0x258] sm:$0xff]
    %v135 = vld [vmem:[#allocation9 + $0x260] sm:$0xff]
    %v136 = vld [vmem:[#allocation9 + $0x268] sm:$0xff]
    %v137 = vld [vmem:[#allocation9 + $0x270] sm:$0xff]
    %v138 = vld [vmem:[#allocation9 + $0x278] sm:$0xff]
    %v139 = vld [vmem:[#allocation9 + $0x280] sm:$0xff]
    %v140 = vld [vmem:[#allocation9 + $0x288] sm:$0xff]
    %v141 = vld [vmem:[#allocation9 + $0x290] sm:$0xff]
    %v142 = vld [vmem:[#allocation9 + $0x298] sm:$0xff]
    %v143 = vld [vmem:[#allocation9 + $0x2a0] sm:$0xff]
    %v144 = vld [vmem:[#allocation9 + $0x2a8] sm:$0xff]
    %v145 = vld [vmem:[#allocation9 + $0x2b0] sm:$0xff]
    %v146 = vld [vmem:[#allocation9 + $0x2b8] sm:$0xff]
    %v147 = vld [vmem:[#allocation9 + $0x2c0] sm:$0xff]
    %v148 = vld [vmem:[#allocation9 + $0x2c8] sm:$0xff]
    %v149 = vld [vmem:[#allocation9 + $0x2d0] sm:$0xff]
    %v150 = vld [vmem:[#allocation9 + $0x2d8] sm:$0xff]
    %v151 = vld [vmem:[#allocation9 + $0x2e0] sm:$0xff]
    %v152 = vld [vmem:[#allocation9 + $0x2e8] sm:$0xff]
    %v153 = vld [vmem:[#allocation9 + $0x2f0] sm:$0xff]
    %v154 = vld [vmem:[#allocation9 + $0x2f8] sm:$0xff]
    %v155 = vld [vmem:[%s4] sm:$0x3f]
    %v156 = vld [vmem:[#allocation7] sm:$0x3]
    %s157 = sld [smem:[#allocation3]]
    %s158 = sshra.s32 %s157, 3
    %s159 = sand.u32 %s157, 7
    %s160 = sshra.s32 %s157, 3
    %s161 = sand.u32 %s157, 7
    %s162 = smul.u32 %s158, 6
    %s163 = smul.u32 %s162, 8
    %s164 = sadd.s32 %s163, %s161
    %s165 = scalar_lea.vmem [#allocation4], %s164
    %v166 = vld [vmem:[%s165] ss:$8 sm:$0xf]
    %v167 = vld [vmem:[%s165] ss:$8 sm:$0x30]
    %v168 = vor.u32 %v166, %v167
    %v170 = vlaneseq
    %v171 = vshrl.u32 %v170, 7
    %v172 = vsub.s32 0, %v171
    %v173 = vrot.slane %v156, %v172
    %v174 = vlaneseq
    %v175 = vshrl.u32 %v174, 7
    %v176 = vsub.s32 1, %v175
    %v177 = vrot.slane %v156, %v176
    %v180 = vpack.c.bf16 %v173, %v173
    %v181 = vpack.c.bf16 %v177, %v177
    %v278 = vunpack.c.l.b16 %v59
    %v279 = vunpack.c.h.b16 %v59
    %v280 = vunpack.c.l.b16 %v60
    %v281 = vunpack.c.h.b16 %v60
    %v282 = vunpack.c.l.b16 %v61
    %v283 = vunpack.c.h.b16 %v61
    %v284 = vunpack.c.l.b16 %v62
    %v285 = vunpack.c.h.b16 %v62
    %v286 = vunpack.c.l.b16 %v63
    %v287 = vunpack.c.h.b16 %v63
    %v288 = vunpack.c.l.b16 %v64
    %v289 = vunpack.c.h.b16 %v64
    %v290 = vunpack.c.l.b16 %v65
    %v291 = vunpack.c.h.b16 %v65
    %v292 = vunpack.c.l.b16 %v66
    %v293 = vunpack.c.h.b16 %v66
    %v294 = vunpack.c.l.b16 %v67
    %v295 = vunpack.c.h.b16 %v67
    %v296 = vunpack.c.l.b16 %v68
    %v297 = vunpack.c.h.b16 %v68
    %v298 = vunpack.c.l.b16 %v69
    %v299 = vunpack.c.h.b16 %v69
    %v300 = vunpack.c.l.b16 %v70
    %v301 = vunpack.c.h.b16 %v70
    %v302 = vunpack.c.l.b16 %v71
    %v303 = vunpack.c.h.b16 %v71
    %v304 = vunpack.c.l.b16 %v72
    %v305 = vunpack.c.h.b16 %v72
    %v306 = vunpack.c.l.b16 %v73
    %v307 = vunpack.c.h.b16 %v73
    %v308 = vunpack.c.l.b16 %v74
    %v309 = vunpack.c.h.b16 %v74
    %v310 = vunpack.c.l.b16 %v75
    %v311 = vunpack.c.h.b16 %v75
    %v312 = vunpack.c.l.b16 %v76
    %v313 = vunpack.c.h.b16 %v76
    %v314 = vunpack.c.l.b16 %v77
    %v315 = vunpack.c.h.b16 %v77
    %v316 = vunpack.c.l.b16 %v78
    %v317 = vunpack.c.h.b16 %v78
    %v318 = vunpack.c.l.b16 %v79
    %v319 = vunpack.c.h.b16 %v79
    %v320 = vunpack.c.l.b16 %v80
    %v321 = vunpack.c.h.b16 %v80
    %v322 = vunpack.c.l.b16 %v81
    %v323 = vunpack.c.h.b16 %v81
    %v324 = vunpack.c.l.b16 %v82
    %v325 = vunpack.c.h.b16 %v82
    %v326 = vunpack.c.l.b16 %v83
    %v327 = vunpack.c.h.b16 %v83
    %v328 = vunpack.c.l.b16 %v84
    %v329 = vunpack.c.h.b16 %v84
    %v330 = vunpack.c.l.b16 %v85
    %v331 = vunpack.c.h.b16 %v85
    %v332 = vunpack.c.l.b16 %v86
    %v333 = vunpack.c.h.b16 %v86
    %v334 = vunpack.c.l.b16 %v87
    %v335 = vunpack.c.h.b16 %v87
    %v336 = vunpack.c.l.b16 %v88
    %v337 = vunpack.c.h.b16 %v88
    %v338 = vunpack.c.l.b16 %v89
    %v339 = vunpack.c.h.b16 %v89
    %v340 = vunpack.c.l.b16 %v90
    %v341 = vunpack.c.h.b16 %v90
    %v342 = vunpack.c.l.b16 %v91
    %v343 = vunpack.c.h.b16 %v91
    %v344 = vunpack.c.l.b16 %v92
    %v345 = vunpack.c.h.b16 %v92
    %v346 = vunpack.c.l.b16 %v93
    %v347 = vunpack.c.h.b16 %v93
    %v348 = vunpack.c.l.b16 %v94
    %v349 = vunpack.c.h.b16 %v94
    %v350 = vunpack.c.l.b16 %v95
    %v351 = vunpack.c.h.b16 %v95
    %v352 = vunpack.c.l.b16 %v96
    %v353 = vunpack.c.h.b16 %v96
    %v354 = vunpack.c.l.b16 %v97
    %v355 = vunpack.c.h.b16 %v97
    %v356 = vunpack.c.l.b16 %v98
    %v357 = vunpack.c.h.b16 %v98
    %v358 = vunpack.c.l.b16 %v99
    %v359 = vunpack.c.h.b16 %v99
    %v360 = vunpack.c.l.b16 %v100
    %v361 = vunpack.c.h.b16 %v100
    %v362 = vunpack.c.l.b16 %v101
    %v363 = vunpack.c.h.b16 %v101
    %v364 = vunpack.c.l.b16 %v102
    %v365 = vunpack.c.h.b16 %v102
    %v366 = vunpack.c.l.b16 %v103
    %v367 = vunpack.c.h.b16 %v103
    %v368 = vunpack.c.l.b16 %v104
    %v369 = vunpack.c.h.b16 %v104
    %v370 = vunpack.c.l.b16 %v105
    %v371 = vunpack.c.h.b16 %v105
    %v372 = vunpack.c.l.b16 %v106
    %v373 = vunpack.c.h.b16 %v106
    %v374 = vunpack.c.l.b16 %v107
    %v375 = vunpack.c.h.b16 %v107
    %v376 = vunpack.c.l.b16 %v108
    %v377 = vunpack.c.h.b16 %v108
    %v378 = vunpack.c.l.b16 %v109
    %v379 = vunpack.c.h.b16 %v109
    %v380 = vunpack.c.l.b16 %v110
    %v381 = vunpack.c.h.b16 %v110
    %v382 = vunpack.c.l.b16 %v111
    %v383 = vunpack.c.h.b16 %v111
    %v384 = vunpack.c.l.b16 %v112
    %v385 = vunpack.c.h.b16 %v112
    %v386 = vunpack.c.l.b16 %v113
    %v387 = vunpack.c.h.b16 %v113
    %v388 = vunpack.c.l.b16 %v114
    %v389 = vunpack.c.h.b16 %v114
    %v390 = vunpack.c.l.b16 %v115
    %v391 = vunpack.c.h.b16 %v115
    %v392 = vunpack.c.l.b16 %v116
    %v393 = vunpack.c.h.b16 %v116
    %v394 = vunpack.c.l.b16 %v117
    %v395 = vunpack.c.h.b16 %v117
    %v396 = vunpack.c.l.b16 %v118
    %v397 = vunpack.c.h.b16 %v118
    %v398 = vunpack.c.l.b16 %v119
    %v399 = vunpack.c.h.b16 %v119
    %v400 = vunpack.c.l.b16 %v120
    %v401 = vunpack.c.h.b16 %v120
    %v402 = vunpack.c.l.b16 %v121
    %v403 = vunpack.c.h.b16 %v121
    %v404 = vunpack.c.l.b16 %v122
    %v405 = vunpack.c.h.b16 %v122
    %v406 = vunpack.c.l.b16 %v123
    %v407 = vunpack.c.h.b16 %v123
    %v408 = vunpack.c.l.b16 %v124
    %v409 = vunpack.c.h.b16 %v124
    %v410 = vunpack.c.l.b16 %v125
    %v411 = vunpack.c.h.b16 %v125
    %v412 = vunpack.c.l.b16 %v126
    %v413 = vunpack.c.h.b16 %v126
    %v414 = vunpack.c.l.b16 %v127
    %v415 = vunpack.c.h.b16 %v127
    %v416 = vunpack.c.l.b16 %v128
    %v417 = vunpack.c.h.b16 %v128
    %v418 = vunpack.c.l.b16 %v129
    %v419 = vunpack.c.h.b16 %v129
    %v420 = vunpack.c.l.b16 %v130
    %v421 = vunpack.c.h.b16 %v130
    %v422 = vunpack.c.l.b16 %v131
    %v423 = vunpack.c.h.b16 %v131
    %v424 = vunpack.c.l.b16 %v132
    %v425 = vunpack.c.h.b16 %v132
    %v426 = vunpack.c.l.b16 %v133
    %v427 = vunpack.c.h.b16 %v133
    %v428 = vunpack.c.l.b16 %v134
    %v429 = vunpack.c.h.b16 %v134
    %v430 = vunpack.c.l.b16 %v135
    %v431 = vunpack.c.h.b16 %v135
    %v432 = vunpack.c.l.b16 %v136
    %v433 = vunpack.c.h.b16 %v136
    %v434 = vunpack.c.l.b16 %v137
    %v435 = vunpack.c.h.b16 %v137
    %v436 = vunpack.c.l.b16 %v138
    %v437 = vunpack.c.h.b16 %v138
    %v438 = vunpack.c.l.b16 %v139
    %v439 = vunpack.c.h.b16 %v139
    %v440 = vunpack.c.l.b16 %v140
    %v441 = vunpack.c.h.b16 %v140
    %v442 = vunpack.c.l.b16 %v141
    %v443 = vunpack.c.h.b16 %v141
    %v444 = vunpack.c.l.b16 %v142
    %v445 = vunpack.c.h.b16 %v142
    %v446 = vunpack.c.l.b16 %v143
    %v447 = vunpack.c.h.b16 %v143
    %v448 = vunpack.c.l.b16 %v144
    %v449 = vunpack.c.h.b16 %v144
    %v450 = vunpack.c.l.b16 %v145
    %v451 = vunpack.c.h.b16 %v145
    %v452 = vunpack.c.l.b16 %v146
    %v453 = vunpack.c.h.b16 %v146
    %v454 = vunpack.c.l.b16 %v147
    %v455 = vunpack.c.h.b16 %v147
    %v456 = vunpack.c.l.b16 %v148
    %v457 = vunpack.c.h.b16 %v148
    %v458 = vunpack.c.l.b16 %v149
    %v459 = vunpack.c.h.b16 %v149
    %v460 = vunpack.c.l.b16 %v150
    %v461 = vunpack.c.h.b16 %v150
    %v462 = vunpack.c.l.b16 %v151
    %v463 = vunpack.c.h.b16 %v151
    %v464 = vunpack.c.l.b16 %v152
    %v465 = vunpack.c.h.b16 %v152
    %v466 = vunpack.c.l.b16 %v153
    %v467 = vunpack.c.h.b16 %v153
    %v468 = vunpack.c.l.b16 %v154
    %v469 = vunpack.c.h.b16 %v154
    %v470 = vpack.c.b16 %v284, %v278
    %v471 = vpack.c.b16 %v285, %v279
    %v472 = vpack.c.b16 %v286, %v280
    %v473 = vpack.c.b16 %v287, %v281
    %v474 = vpack.c.b16 %v288, %v282
    %v475 = vpack.c.b16 %v289, %v283
    %v476 = vpack.c.b16 %v296, %v290
    %v477 = vpack.c.b16 %v297, %v291
    %v478 = vpack.c.b16 %v298, %v292
    %v479 = vpack.c.b16 %v299, %v293
    %v480 = vpack.c.b16 %v300, %v294
    %v481 = vpack.c.b16 %v301, %v295
    %v482 = vpack.c.b16 %v308, %v302
    %v483 = vpack.c.b16 %v309, %v303
    %v484 = vpack.c.b16 %v310, %v304
    %v485 = vpack.c.b16 %v311, %v305
    %v486 = vpack.c.b16 %v312, %v306
    %v487 = vpack.c.b16 %v313, %v307
    %v488 = vpack.c.b16 %v320, %v314
    %v489 = vpack.c.b16 %v321, %v315
    %v490 = vpack.c.b16 %v322, %v316
    %v491 = vpack.c.b16 %v323, %v317
    %v492 = vpack.c.b16 %v324, %v318
    %v493 = vpack.c.b16 %v325, %v319
    %v494 = vpack.c.b16 %v332, %v326
    %v495 = vpack.c.b16 %v333, %v327
    %v496 = vpack.c.b16 %v334, %v328
    %v497 = vpack.c.b16 %v335, %v329
    %v498 = vpack.c.b16 %v336, %v330
    %v499 = vpack.c.b16 %v337, %v331
    %v500 = vpack.c.b16 %v344, %v338
    %v501 = vpack.c.b16 %v345, %v339
    %v502 = vpack.c.b16 %v346, %v340
    %v503 = vpack.c.b16 %v347, %v341
    %v504 = vpack.c.b16 %v348, %v342
    %v505 = vpack.c.b16 %v349, %v343
    %v506 = vpack.c.b16 %v356, %v350
    %v507 = vpack.c.b16 %v357, %v351
    %v508 = vpack.c.b16 %v358, %v352
    %v509 = vpack.c.b16 %v359, %v353
    %v510 = vpack.c.b16 %v360, %v354
    %v511 = vpack.c.b16 %v361, %v355
    %v512 = vpack.c.b16 %v368, %v362
    %v513 = vpack.c.b16 %v369, %v363
    %v514 = vpack.c.b16 %v370, %v364
    %v515 = vpack.c.b16 %v371, %v365
    %v516 = vpack.c.b16 %v372, %v366
    %v517 = vpack.c.b16 %v373, %v367
    %v518 = vpack.c.b16 %v380, %v374
    %v519 = vpack.c.b16 %v381, %v375
    %v520 = vpack.c.b16 %v382, %v376
    %v521 = vpack.c.b16 %v383, %v377
    %v522 = vpack.c.b16 %v384, %v378
    %v523 = vpack.c.b16 %v385, %v379
    %v524 = vpack.c.b16 %v392, %v386
    %v525 = vpack.c.b16 %v393, %v387
    %v526 = vpack.c.b16 %v394, %v388
    %v527 = vpack.c.b16 %v395, %v389
    %v528 = vpack.c.b16 %v396, %v390
    %v529 = vpack.c.b16 %v397, %v391
    %v530 = vpack.c.b16 %v404, %v398
    %v531 = vpack.c.b16 %v405, %v399
    %v532 = vpack.c.b16 %v406, %v400
    %v533 = vpack.c.b16 %v407, %v401
    %v534 = vpack.c.b16 %v408, %v402
    %v535 = vpack.c.b16 %v409, %v403
    %v536 = vpack.c.b16 %v416, %v410
    %v537 = vpack.c.b16 %v417, %v411
    %v538 = vpack.c.b16 %v418, %v412
    %v539 = vpack.c.b16 %v419, %v413
    %v540 = vpack.c.b16 %v420, %v414
    %v541 = vpack.c.b16 %v421, %v415
    %v542 = vpack.c.b16 %v428, %v422
    %v543 = vpack.c.b16 %v429, %v423
    %v544 = vpack.c.b16 %v430, %v424
    %v545 = vpack.c.b16 %v431, %v425
    %v546 = vpack.c.b16 %v432, %v426
    %v547 = vpack.c.b16 %v433, %v427
    %v548 = vpack.c.b16 %v440, %v434
    %v549 = vpack.c.b16 %v441, %v435
    %v550 = vpack.c.b16 %v442, %v436
    %v551 = vpack.c.b16 %v443, %v437
    %v552 = vpack.c.b16 %v444, %v438
    %v553 = vpack.c.b16 %v445, %v439
    %v554 = vpack.c.b16 %v452, %v446
    %v555 = vpack.c.b16 %v453, %v447
    %v556 = vpack.c.b16 %v454, %v448
    %v557 = vpack.c.b16 %v455, %v449
    %v558 = vpack.c.b16 %v456, %v450
    %v559 = vpack.c.b16 %v457, %v451
    %v560 = vpack.c.b16 %v464, %v458
    %v561 = vpack.c.b16 %v465, %v459
    %v562 = vpack.c.b16 %v466, %v460
    %v563 = vpack.c.b16 %v467, %v461
    %v564 = vpack.c.b16 %v468, %v462
    %v565 = vpack.c.b16 %v469, %v463
    %662 = vmatprep.subr.bf16.mxu0 %v513
    %663 = vmatpush1.bf16.msra.mxu0 %v512
    %664 = vmatprep.subr.bf16.mxu0 %v507
    %665 = vmatpush1.bf16.msra.mxu0 %v506
    %666 = vmatprep.subr.bf16.mxu0 %v501
    %667 = vmatpush1.bf16.msra.mxu0 %v500
    %668 = vmatprep.subr.bf16.mxu0 %v495
    %669 = vmatpush1.bf16.msra.mxu0 %v494
    %670 = vmatprep.subr.bf16.mxu0 %v489
    %671 = vmatpush1.bf16.msra.mxu0 %v488
    %672 = vmatprep.subr.bf16.mxu0 %v483
    %673 = vmatpush1.bf16.msra.mxu0 %v482
    %674 = vmatprep.subr.bf16.mxu0 %v477
    %675 = vmatpush1.bf16.msra.mxu0 %v476
    %676 = vmatprep.subr.bf16.mxu0 %v471
    %677 = vmatpush1.bf16.msra.mxu0 %v470
    %678 = vmatprep.subr.bf16.mxu0 %v561
    %679 = vmatpush2.bf16.msra.mxu0 %v560
    %680 = vmatprep.subr.bf16.mxu0 %v555
    %681 = vmatpush2.bf16.msra.mxu0 %v554
    %682 = vmatprep.subr.bf16.mxu0 %v549
    %683 = vmatpush2.bf16.msra.mxu0 %v548
    %684 = vmatprep.subr.bf16.mxu0 %v543
    %685 = vmatpush2.bf16.msra.mxu0 %v542
    %686 = vmatprep.subr.bf16.mxu0 %v537
    %687 = vmatpush2.bf16.msra.mxu0 %v536
    %688 = vmatprep.subr.bf16.mxu0 %v531
    %689 = vmatpush2.bf16.msra.mxu0 %v530
    %690 = vmatprep.subr.bf16.mxu0 %v525
    %691 = vmatpush2.bf16.msra.mxu0 %v524
    %692 = vmatprep.subr.bf16.mxu0 %v519
    %693 = vmatpush2.bf16.msra.mxu0 %v518
    %694 = vmatprep.mubr.bf16.mxu0 %v181
    %695 = vmatmul.mubr.bf16.gmra.mxu0 %v180
    %v696 = vpop.f32.mrf.mxu0
    %v697 = vadd.f32 0.0, %v696
    %v698 = vpop.f32.mrf.mxu0
    %v699 = vadd.f32 0.0, %v698
    %v700 = vpop.f32.mrf.mxu0
    %v701 = vpop.f32.mrf.mxu0
    %702 = vdwg.mxu0
    %703 = vmatprep.subr.bf16.mxu0 %v515
    %704 = vmatpush1.bf16.msra.mxu0 %v514
    %705 = vmatprep.subr.bf16.mxu0 %v509
    %706 = vmatpush1.bf16.msra.mxu0 %v508
    %707 = vmatprep.subr.bf16.mxu0 %v503
    %708 = vmatpush1.bf16.msra.mxu0 %v502
    %709 = vmatprep.subr.bf16.mxu0 %v497
    %710 = vmatpush1.bf16.msra.mxu0 %v496
    %711 = vmatprep.subr.bf16.mxu0 %v491
    %712 = vmatpush1.bf16.msra.mxu0 %v490
    %713 = vmatprep.subr.bf16.mxu0 %v485
    %714 = vmatpush1.bf16.msra.mxu0 %v484
    %715 = vmatprep.subr.bf16.mxu0 %v479
    %716 = vmatpush1.bf16.msra.mxu0 %v478
    %717 = vmatprep.subr.bf16.mxu0 %v473
    %718 = vmatpush1.bf16.msra.mxu0 %v472
    %719 = vmatprep.subr.bf16.mxu0 %v563
    %720 = vmatpush2.bf16.msra.mxu0 %v562
    %721 = vmatprep.subr.bf16.mxu0 %v557
    %722 = vmatpush2.bf16.msra.mxu0 %v556
    %723 = vmatprep.subr.bf16.mxu0 %v551
    %724 = vmatpush2.bf16.msra.mxu0 %v550
    %725 = vmatprep.subr.bf16.mxu0 %v545
    %726 = vmatpush2.bf16.msra.mxu0 %v544
    %727 = vmatprep.subr.bf16.mxu0 %v539
    %728 = vmatpush2.bf16.msra.mxu0 %v538
    %729 = vmatprep.subr.bf16.mxu0 %v533
    %730 = vmatpush2.bf16.msra.mxu0 %v532
    %731 = vmatprep.subr.bf16.mxu0 %v527
    %732 = vmatpush2.bf16.msra.mxu0 %v526
    %733 = vmatprep.subr.bf16.mxu0 %v521
    %734 = vmatpush2.bf16.msra.mxu0 %v520
    %735 = vmatprep.mubr.bf16.mxu0 %v181
    %736 = vmatmul.mubr.bf16.gmra.mxu0 %v180
    %v737 = vpop.f32.mrf.mxu0
    %v738 = vadd.f32 0.0, %v737
    %v739 = vpop.f32.mrf.mxu0
    %v740 = vadd.f32 0.0, %v739
    %v741 = vpop.f32.mrf.mxu0
    %v742 = vpop.f32.mrf.mxu0
    %743 = vdwg.mxu0
    %744 = vmatprep.subr.bf16.mxu0 %v517
    %745 = vmatpush1.bf16.msra.mxu0 %v516
    %746 = vmatprep.subr.bf16.mxu0 %v511
    %747 = vmatpush1.bf16.msra.mxu0 %v510
    %748 = vmatprep.subr.bf16.mxu0 %v505
    %749 = vmatpush1.bf16.msra.mxu0 %v504
    %750 = vmatprep.subr.bf16.mxu0 %v499
    %751 = vmatpush1.bf16.msra.mxu0 %v498
    %752 = vmatprep.subr.bf16.mxu0 %v493
    %753 = vmatpush1.bf16.msra.mxu0 %v492
    %754 = vmatprep.subr.bf16.mxu0 %v487
    %755 = vmatpush1.bf16.msra.mxu0 %v486
    %756 = vmatprep.subr.bf16.mxu0 %v481
    %757 = vmatpush1.bf16.msra.mxu0 %v480
    %758 = vmatprep.subr.bf16.mxu0 %v475
    %759 = vmatpush1.bf16.msra.mxu0 %v474
    %760 = vmatprep.subr.bf16.mxu0 %v565
    %761 = vmatpush2.bf16.msra.mxu0 %v564
    %762 = vmatprep.subr.bf16.mxu0 %v559
    %763 = vmatpush2.bf16.msra.mxu0 %v558
    %764 = vmatprep.subr.bf16.mxu0 %v553
    %765 = vmatpush2.bf16.msra.mxu0 %v552
    %766 = vmatprep.subr.bf16.mxu0 %v547
    %767 = vmatpush2.bf16.msra.mxu0 %v546
    %768 = vmatprep.subr.bf16.mxu0 %v541
    %769 = vmatpush2.bf16.msra.mxu0 %v540
    %770 = vmatprep.subr.bf16.mxu0 %v535
    %771 = vmatpush2.bf16.msra.mxu0 %v534
    %772 = vmatprep.subr.bf16.mxu0 %v529
    %773 = vmatpush2.bf16.msra.mxu0 %v528
    %774 = vmatprep.subr.bf16.mxu0 %v523
    %775 = vmatpush2.bf16.msra.mxu0 %v522
    %776 = vmatprep.mubr.bf16.mxu0 %v181
    %777 = vmatmul.mubr.bf16.gmra.mxu0 %v180
    %v778 = vpop.f32.mrf.mxu0
    %v779 = vadd.f32 0.0, %v778
    %v780 = vpop.f32.mrf.mxu0
    %v781 = vadd.f32 0.0, %v780
    %v782 = vpop.f32.mrf.mxu0
    %v783 = vpop.f32.mrf.mxu0
    %784 = vdwg.mxu0
    %v789 = vcombine.low %v697, %v699
    %v790 = vcombine.low %v738, %v740
    %v792 = vunpack.c.l.s4 1966171168
    %v793 = vunpack.c.0.s8 %v792
    %v794 = vlaneseq
    %v795 = vshrl.u32 %v794, 7
    %v796 = vsub.s32 %v793, %v795
    %v797 = vrot.slane %v789, %v796
    %v799 = vunpack.c.l.s4 1966171168
    %v800 = vunpack.c.0.s8 %v799
    %v801 = vlaneseq
    %v802 = vshrl.u32 %v801, 7
    %v803 = vsub.s32 %v800, %v802
    %v804 = vrot.slane %v790, %v803
    %v805 = vcombine.low %v797, %v804
    %v807 = vunpack.c.l.s4 1966171168
    %v808 = vunpack.c.0.s8 %v807
    %v809 = vlaneseq
    %v810 = vshrl.u32 %v809, 7
    %v811 = vsub.s32 %v808, %v810
    %v812 = vrot.slane %v805, %v811
    %v814 = vadd.f32 %v168, %v812
    %v815 = vadd.f32 %v814, %v155
    %v816 = vxor.u32 %v815, 2147483648
    %v817 = vmul.f32 %v816, 1.442695
    %v818 = vpow.pop %v817
    %v819 = vadd.f32 %v818, 1.0
    %v820 = vrcp.pop %v819
    %v821 = vmul.f32 1.0, %v820
    %v823 = vlaneseq
    %v824 = vshrl.u32 %v823, 7
    %v825 = vsub.s32 4, %v824
    %v826 = vrot.slane %v155, %v825
    %v827 = vlaneseq
    %v828 = vshrl.u32 %v827, 7
    %v829 = vsub.s32 5, %v828
    %v830 = vrot.slane %v155, %v829
    %v833 = vadd.f32 %v779, %v826
    %v834 = vadd.f32 %v781, %v830
    %v837 = vcombine.low %v833, %v834
    %v839 = vunpack.c.l.s4 1966171168
    %v840 = vunpack.c.0.s8 %v839
    %v841 = vlaneseq
    %v842 = vshrl.u32 %v841, 7
    %v843 = vsub.s32 %v840, %v842
    %v844 = vrot.slane %v837, %v843
    %v846 = vunpack.c.l.s4 1966171168
    %v847 = vunpack.c.0.s8 %v846
    %v848 = vlaneseq
    %v849 = vshrl.u32 %v848, 7
    %v850 = vsub.s32 %v847, %v849
    %v851 = vrot.slane %v844, %v850
    %v853 = vmul.f32 %v821, %v851
    %v855 = vrot.slane %v168, 4
    %v857 = vadd.f32 %v855, %v853
    %v858 = vtanh.pop %v857
    %v860 = vrot.slane %v821, 2
    %v862 = vsub.f32 1.0, %v860
    %v863 = vmul.f32 %v862, %v858
    %v864 = vmul.f32 %v860, %v156
    %v865 = vadd.f32 %v863, %v864
    %v866 = vlaneseq
    %vm867 = vcmp.ge.s32.totalorder %v866, 0
    %vm868 = vcmp.lt.s32.totalorder %v866, 256
    %vm869 = vmand %vm867, %vm868
    %870 = vst.msk [vmem:[#allocation10] sm:$0x3] %vm869, %v865
    // Predicated region
    $region30: #{tpu_custom_call.1} parent=1 // pred_check
      _
    $region31: #{tpu_custom_call.1} parent=1 // pred_check_branch
      %872 = sbr.rel (0) target = $region33
    $region32: #{tpu_custom_call.1} parent=1 // pred_region
      %s874 = ssub.s32 32, 32
      %875 = vsyncadd [#allocation6], %s874
      %s877 = sshll.u32 [#allocation10], 4
      %s878 = int_to_ptr.vmem [resolvable:$true] %s877
      %880 = dma.vmem_to_hbm [thread:$0]  %s878, 32, %s5, [#allocation6]
    $region33: #{tpu_custom_call.1} parent=1 // pred_fallthru
      _
    // Predicated region
    $region34: #{tpu_custom_call.1} parent=1 // pred_check
      _
    $region35: #{tpu_custom_call.1} parent=1 // pred_check_branch
      %882 = sbr.rel (0) target = $region37
    $region36: #{tpu_custom_call.1} parent=1 // pred_region
      %883 = dma.done [#allocation6], 32
    $region37: #{tpu_custom_call.1} parent=1 // pred_fallthru
      _
    %884 = vsyncpa [#allocation5], 1
    %885 = vsyncpa [#allocation8], 1
    %886 = vsyncpa [#allocation6], 1

</llo_original>
